<compile_context>
chip_gen: v7x
topology: tpu7x:2x2x1
jax: 0.10.0
libtpu: 0.0.40
codegen_flags: <defaults>
</compile_context>

<pallas_src>
import functools

import jax
import jax.numpy as jnp
import numpy as np
from jax.experimental import pallas as pl
from jax.experimental.pallas import tpu as pltpu

FC1 = 256
FC2 = 256
LANE = 128  # lane granularity for the batch tile (lane-dense output store)


def _round_up(x, m):
    return (x + m - 1) // m * m


def critic_kernel(x_ref, w1_ref, b1_ref, w2_ref, b2_ref, w3_ref, b3_ref, o_ref):
    # Layer 1: Linear + ReLU. bf16 into the MXU, f32 accumulate, f32 VPU math.
    h1 = jnp.dot(x_ref[...].astype(jnp.bfloat16), w1_ref[...],
                 preferred_element_type=jnp.float32)
    h1 = jnp.maximum(h1 + b1_ref[...], 0.0)
    # Layer 2: Linear + ReLU.
    h2 = jnp.dot(h1.astype(jnp.bfloat16), w2_ref[...],
                 preferred_element_type=jnp.float32)
    h2 = jnp.maximum(h2 + b2_ref[...], 0.0)
    # Layer 3 as an "NT" contraction: (8, FC2) x (tm, FC2) contracted over FC2
    # -> (8, tm).  The 8 lhs rows are identical copies of w3, so row 0 is the value
    # for every batch row, already lane-dense over batch (no transpose/relayout).
    vt = jax.lax.dot_general(
        w3_ref[...], h2.astype(jnp.bfloat16),
        dimension_numbers=(((1,), (1,)), ((), ())),
        preferred_element_type=jnp.float32)
    o_ref[...] = (vt[0:1, :] + b3_ref[...]).astype(o_ref.dtype)


def prepare_params(params):
    """Cast weights to bf16 (MXU-native, halves weight HBM traffic).  The final
    (FC2, 1) weight is stored as a (8, FC2) row (replicated across sublanes) so the
    last layer can run as an NT matmul whose result is lane-dense over batch."""
    w1, b1, w2, b2, w3, b3 = params
    w3_row = jnp.broadcast_to(w3.reshape(1, FC2), (8, FC2))
    return (w1.astype(jnp.bfloat16), b1.astype(jnp.float32),
            w2.astype(jnp.bfloat16), b2.astype(jnp.float32),
            w3_row.astype(jnp.bfloat16), b3.reshape(1, 1).astype(jnp.float32))


@functools.partial(jax.jit, static_argnames=("block_m",))
def critic_forward(state, prepared, block_m=1024):
    """state: (B, input_dim) float32 (or bfloat16).  prepared: prepare_params output.
    Returns value: (B, 1) float32."""
    assert block_m % LANE == 0 and block_m >= LANE
    w1, b1, w2, b2, w3_row, b3 = prepared
    B, D = state.shape

    # Batch tile: multiple of 128 lanes (unmasked lane-dense output store), capped at
    # block_m for VMEM, and at ~B/2 so small batches still yield >=2 parallel grid
    # steps for v7x's two TensorCores.
    tm = min(block_m, _round_up((B + 1) // 2, LANE))

    # No full-batch pad (that was an extra un-fused HBM pass).  Only pad when the
    # batch is smaller than a single tile.
    rows = B
    if rows < tm:
        state = jnp.pad(state, ((0, tm - rows), (0, 0)))
        rows = tm

    num_tiles = pl.cdiv(rows, tm)
    out_w = num_tiles * tm

    const = lambda shape: pl.BlockSpec(shape, lambda i: (0,) * len(shape))

    out = pl.pallas_call(
        critic_kernel,
        out_shape=jax.ShapeDtypeStruct((1, out_w), jnp.float32),
        grid=(num_tiles,),
        in_specs=[
            pl.BlockSpec((tm, D), lambda i: (i, 0)),     # state: varies with grid
            const(w1.shape), const(b1.shape),            # weights/biases: resident
            const(w2.shape), const(b2.shape),
            const(w3_row.shape), const(b3.shape),
        ],
        out_specs=pl.BlockSpec((1, tm), lambda i: (0, i)),  # lane-dense over batch
        compiler_params=pltpu.CompilerParams(
            dimension_semantics=("parallel",)),
    )(state, w1, b1, w2, b2, w3_row, b3)

    # (1, out_w) -> (B, 1).  Only ~4 B/row of traffic (vs 1 KB/row previously).
    return out[0, :B].reshape(B, 1)


def init_params(key, input_dim, fc1_dims=FC1, fc2_dims=FC2):
    """PyTorch-style uniform(+-1/sqrt(fan_in)) init, stored as (in, out) f32."""
    ks = jax.random.split(key, 6)

    def linear(kw, kb, fan_in, fan_out):
        bound = 1.0 / np.sqrt(fan_in)
        w = jax.random.uniform(kw, (fan_in, fan_out), jnp.float32, -bound, bound)
        b = jax.random.uniform(kb, (1, fan_out), jnp.float32, -bound, bound)
        return w, b

    w1, b1 = linear(ks[0], ks[1], input_dim, fc1_dims)
    w2, b2 = linear(ks[2], ks[3], fc1_dims, fc2_dims)
    w3, b3 = linear(ks[4], ks[5], fc2_dims, 1)
    return (w1, b1, w2, b2, w3, b3)


def critic_reference_f32(state, params):
    w1, b1, w2, b2, w3, b3 = params
    h1 = jnp.maximum(state @ w1 + b1, 0.0)
    h2 = jnp.maximum(h1 @ w2 + b2, 0.0)
    return h2 @ w3 + b3


def critic_reference_bf16(state, params):
    """Reference matching the kernel's numerics (bf16 matmul inputs, f32 accum)."""
    w1, b1, w2, b2, w3, b3 = params
    bf, f32 = jnp.bfloat16, jnp.float32
    h1 = jnp.maximum(jnp.dot(state.astype(bf), w1.astype(bf),
                             preferred_element_type=f32) + b1, 0.0)
    h2 = jnp.maximum(jnp.dot(h1.astype(bf), w2.astype(bf),
                             preferred_element_type=f32) + b2, 0.0)
    return jnp.dot(h2.astype(bf), w3.astype(bf),
                   preferred_element_type=f32) + b3


if __name__ == "__main__":
    key = jax.random.PRNGKey(0)
    k_params, k_state, k_state2 = jax.random.split(key, 3)

    input_dim = 32                       # input_dims = (32,)
    params = init_params(k_params, input_dim)
    prepared = prepare_params(params)

    # Small batch (single tile, exercises the B < tm path).
    batch = 8
    state = jax.random.normal(k_state, (batch, input_dim), jnp.float32)
    value = jax.block_until_ready(critic_forward(state, prepared))
    assert value.shape == (batch, 1)
    ref_bf16 = critic_reference_bf16(state, params)
    ref_f32 = critic_reference_f32(state, params)
    np.testing.assert_allclose(np.asarray(value), np.asarray(ref_bf16),
                               rtol=2e-3, atol=2e-3)
    np.testing.assert_allclose(np.asarray(value), np.asarray(ref_f32),
                               rtol=2e-2, atol=2e-2)

    # Non-multiple batch exercises the no-pad cdiv grid + ragged last block + the
    # >=2 grid steps (both v7x TensorCores) path.
    batch2 = 300
    state2 = jax.random.normal(k_state2, (batch2, input_dim), jnp.float32)
    value2 = jax.block_until_ready(critic_forward(state2, prepared))
    assert value2.shape == (batch2, 1)
    np.testing.assert_allclose(np.asarray(value2),
                               np.asarray(critic_reference_bf16(state2, params)),
                               rtol=2e-3, atol=2e-3)

    print("KERNEL_OK")
</pallas_src>

<mosaic_0001>
module attributes {stable_mosaic.version = 11 : i64} {
  func.func @critic_kernel(%arg0: i32, %arg1: memref<128x32xf32, #tpu.memory_space<vmem>>, %arg2: memref<32x256xbf16, #tpu.memory_space<vmem>>, %arg3: memref<1x256xf32, #tpu.memory_space<vmem>>, %arg4: memref<256x256xbf16, #tpu.memory_space<vmem>>, %arg5: memref<1x256xf32, #tpu.memory_space<vmem>>, %arg6: memref<8x256xbf16, #tpu.memory_space<vmem>>, %arg7: memref<1x1xf32, #tpu.memory_space<vmem>>, %arg8: memref<1x128xf32, #tpu.memory_space<vmem>>) attributes {dimension_semantics = [#tpu.dimension_semantics<parallel>], iteration_bounds = array<i64: 1>, scalar_prefetch = 0 : i64, scratch_operands = 0 : i64, tpu.core_type = #tpu.core_type<tc>, window_params = [{transform_indices = @transform_0, window_bounds = array<i64: 128, 32>}, {pipeline_mode = #tpu.pipeline_mode<synchronous>, transform_indices = @transform_1, window_bounds = array<i64: 32, 256>}, {pipeline_mode = #tpu.pipeline_mode<synchronous>, transform_indices = @transform_2, window_bounds = array<i64: 1, 256>}, {pipeline_mode = #tpu.pipeline_mode<synchronous>, transform_indices = @transform_3, window_bounds = array<i64: 256, 256>}, {pipeline_mode = #tpu.pipeline_mode<synchronous>, transform_indices = @transform_4, window_bounds = array<i64: 1, 256>}, {pipeline_mode = #tpu.pipeline_mode<synchronous>, transform_indices = @transform_5, window_bounds = array<i64: 8, 256>}, {pipeline_mode = #tpu.pipeline_mode<synchronous>, transform_indices = @transform_6, window_bounds = array<i64: 1, 1>}, {transform_indices = @transform_7, window_bounds = array<i64: 1, 128>}]} {
    %c0 = arith.constant 0 : index
    %c0_0 = arith.constant 0 : index
    %0 = vector.load %arg1[%c0, %c0_0] : memref<128x32xf32, #tpu.memory_space<vmem>>, vector<128x32xf32>
    %1 = arith.truncf %0 : vector<128x32xf32> to vector<128x32xbf16>
    %c0_1 = arith.constant 0 : index
    %c0_2 = arith.constant 0 : index
    %2 = vector.load %arg2[%c0_1, %c0_2] : memref<32x256xbf16, #tpu.memory_space<vmem>>, vector<32x256xbf16>
    %cst = arith.constant dense<0.000000e+00> : vector<128x256xf32>
    %3 = tpu.matmul %1, %2, %cst {dimension_numbers = #tpu.dot_dimension_numbers<[1], [0], [0], [1], [0, 0, 1, 1], [], []>} : vector<128x32xbf16>, vector<32x256xbf16>, vector<128x256xf32> -> vector<128x256xf32>
    %c0_3 = arith.constant 0 : index
    %c0_4 = arith.constant 0 : index
    %4 = vector.load %arg3[%c0_3, %c0_4] : memref<1x256xf32, #tpu.memory_space<vmem>>, vector<1x256xf32>
    %5 = vector.broadcast %4 : vector<1x256xf32> to vector<128x256xf32>
    %6 = arith.addf %3, %5 : vector<128x256xf32>
    %cst_5 = arith.constant 0.000000e+00 : f32
    %7 = vector.broadcast %cst_5 : f32 to vector<128x256xf32>
    %8 = arith.maximumf %6, %7 : vector<128x256xf32>
    %9 = arith.truncf %8 : vector<128x256xf32> to vector<128x256xbf16>
    %c0_6 = arith.constant 0 : index
    %c0_7 = arith.constant 0 : index
    %10 = vector.load %arg4[%c0_6, %c0_7] : memref<256x256xbf16, #tpu.memory_space<vmem>>, vector<256x256xbf16>
    %cst_8 = arith.constant dense<0.000000e+00> : vector<128x256xf32>
    %11 = tpu.matmul %9, %10, %cst_8 {dimension_numbers = #tpu.dot_dimension_numbers<[1], [0], [0], [1], [0, 0, 1, 1], [], []>} : vector<128x256xbf16>, vector<256x256xbf16>, vector<128x256xf32> -> vector<128x256xf32>
    %c0_9 = arith.constant 0 : index
    %c0_10 = arith.constant 0 : index
    %12 = vector.load %arg5[%c0_9, %c0_10] : memref<1x256xf32, #tpu.memory_space<vmem>>, vector<1x256xf32>
    %13 = vector.broadcast %12 : vector<1x256xf32> to vector<128x256xf32>
    %14 = arith.addf %11, %13 : vector<128x256xf32>
    %cst_11 = arith.constant 0.000000e+00 : f32
    %15 = vector.broadcast %cst_11 : f32 to vector<128x256xf32>
    %16 = arith.maximumf %14, %15 : vector<128x256xf32>
    %c0_12 = arith.constant 0 : index
    %c0_13 = arith.constant 0 : index
    %17 = vector.load %arg6[%c0_12, %c0_13] : memref<8x256xbf16, #tpu.memory_space<vmem>>, vector<8x256xbf16>
    %18 = arith.truncf %16 : vector<128x256xf32> to vector<128x256xbf16>
    %cst_14 = arith.constant dense<0.000000e+00> : vector<8x128xf32>
    %19 = tpu.matmul %17, %18, %cst_14 {dimension_numbers = #tpu.dot_dimension_numbers<[1], [1], [0], [0], [0, 0, 1, 0], [], []>} : vector<8x256xbf16>, vector<128x256xbf16>, vector<8x128xf32> -> vector<8x128xf32>
    %20 = vector.extract_strided_slice %19 {offsets = [0, 0], sizes = [1, 128], strides = [1, 1]} : vector<8x128xf32> to vector<1x128xf32>
    %c0_15 = arith.constant 0 : index
    %c0_16 = arith.constant 0 : index
    %21 = vector.load %arg7[%c0_15, %c0_16] : memref<1x1xf32, #tpu.memory_space<vmem>>, vector<1x1xf32>
    %22 = vector.broadcast %21 : vector<1x1xf32> to vector<1x128xf32>
    %23 = arith.addf %20, %22 : vector<1x128xf32>
    %c0_17 = arith.constant 0 : index
    %c0_18 = arith.constant 0 : index
    %24 = vector.load %arg8[%c0_17, %c0_18] : memref<1x128xf32, #tpu.memory_space<vmem>>, vector<1x128xf32>
    tpu.vector_store %arg8[%c0_17, %c0_18], %23 {strides = array<i32>} : memref<1x128xf32, #tpu.memory_space<vmem>>, vector<1x128xf32>,
    return
  }
  func.func @transform_0(%arg0: i32) -> (i32, i32) {
    %c0_i32 = arith.constant 0 : i32
    %c0_i32_0 = arith.constant 0 : i32
    return %arg0, %c0_i32 : i32, i32
  }
  func.func @transform_1(%arg0: i32) -> (i32, i32) {
    %c0_i32 = arith.constant 0 : i32
    %c0_i32_0 = arith.constant 0 : i32
    %c0_i32_1 = arith.constant 0 : i32
    return %c0_i32, %c0_i32_0 : i32, i32
  }
  func.func @transform_2(%arg0: i32) -> (i32, i32) {
    %c0_i32 = arith.constant 0 : i32
    %c0_i32_0 = arith.constant 0 : i32
    %c0_i32_1 = arith.constant 0 : i32
    return %c0_i32, %c0_i32_0 : i32, i32
  }
  func.func @transform_3(%arg0: i32) -> (i32, i32) {
    %c0_i32 = arith.constant 0 : i32
    %c0_i32_0 = arith.constant 0 : i32
    %c0_i32_1 = arith.constant 0 : i32
    return %c0_i32, %c0_i32_0 : i32, i32
  }
  func.func @transform_4(%arg0: i32) -> (i32, i32) {
    %c0_i32 = arith.constant 0 : i32
    %c0_i32_0 = arith.constant 0 : i32
    %c0_i32_1 = arith.constant 0 : i32
    return %c0_i32, %c0_i32_0 : i32, i32
  }
  func.func @transform_5(%arg0: i32) -> (i32, i32) {
    %c0_i32 = arith.constant 0 : i32
    %c0_i32_0 = arith.constant 0 : i32
    %c0_i32_1 = arith.constant 0 : i32
    return %c0_i32, %c0_i32_0 : i32, i32
  }
  func.func @transform_6(%arg0: i32) -> (i32, i32) {
    %c0_i32 = arith.constant 0 : i32
    %c0_i32_0 = arith.constant 0 : i32
    %c0_i32_1 = arith.constant 0 : i32
    return %c0_i32, %c0_i32_0 : i32, i32
  }
  func.func @transform_7(%arg0: i32) -> (i32, i32) {
    %c0_i32 = arith.constant 0 : i32
    %c0_i32_0 = arith.constant 0 : i32
    return %c0_i32, %arg0 : i32, i32
  }
}

</mosaic_0001>

<llo_original>
// kernel: critic_forward.1
$region0: #{critic_forward.1}
  #allocation0 [shape = 'u32[]', space=smem, size = 0x4, offset = 0x4, fixed_abs, tag = 'smem constant byte address 0x4 - core index']
  #allocation1 [shape = 'u32[144,128]{1,0:T(1,128)}', space=vmem, size = 0x12000, scoped, tag = 'internal scratch']
  #allocation2 [shape = 'f32[1,1]{1,0:T(1,128)S(1)}', space=vmem, size = 0x200, scoped, tag = 'scoped memory for critic_forward.1']
  %s0 = inlined_call_operand.vmem [shape: f32[128,32], index: 0, kind: input, shape index: {}]
  %s1 = inlined_call_operand.vmem [shape: bf16[32,256], index: 1, kind: input, shape index: {}]
  %s2 = inlined_call_operand.vmem [shape: f32[1,256], index: 2, kind: input, shape index: {}]
  %s3 = inlined_call_operand.hbm [shape: bf16[256,256], index: 3, kind: input, shape index: {}]
  %s4 = inlined_call_operand.vmem [shape: f32[1,256], index: 4, kind: input, shape index: {}]
  %s5 = inlined_call_operand.vmem [shape: bf16[8,256], index: 5, kind: input, shape index: {}]
  %s6 = inlined_call_operand.<no memory space> [shape: f32[1,1], index: 6, kind: input, shape index: {}]
  %s7 = inlined_call_operand.vmem [shape: f32[1,128], index: 7, kind: output, shape index: {}]
  %s8 = sld [smem:[#allocation0]]
  $region42: #{critic_forward.1} parent=0
    _
  %s10 = ssub.s32 1, %s8
  %s11 = scalar_select 0, %s10, %s8
  %v12 = vstv %s6
  %13 = vst [vmem:[#allocation2] sm:$0x1] %v12
  $region1: #{critic_forward.1} parent=0
    #allocation3 [shape = 'u8[131072]{0}', space=vmem, size = 0x20000, scoped, tag = 'input window, operand 3, single buffered']
    #allocation4 [shape = 's32[1]{0}', space=sflag, size = 0x4, scoped, tag = 'scoped memory for critic_forward.1']
    %14 = vsyncpa [#allocation4], 0
    // Predicated region
    $region2: #{critic_forward.1} parent=1 // pred_check
      _
    $region3: #{critic_forward.1} parent=1 // pred_check_branch
      %16 = sbr.rel (0) target = $region5
    $region4: #{critic_forward.1} parent=1 // pred_region
      _
    $region5: #{critic_forward.1} parent=1 // pred_fallthru
      _
    // Predicated region
    $region6: #{critic_forward.1} parent=1 // pred_check
      _
    $region7: #{critic_forward.1} parent=1 // pred_check_branch
      %18 = sbr.rel (0) target = $region9
    $region8: #{critic_forward.1} parent=1 // pred_region
      _
    $region9: #{critic_forward.1} parent=1 // pred_fallthru
      _
    // Predicated region
    $region10: #{critic_forward.1} parent=1 // pred_check
      _
    $region11: #{critic_forward.1} parent=1 // pred_check_branch
      %20 = sbr.rel (0) target = $region13
    $region12: #{critic_forward.1} parent=1 // pred_region
      _
    $region13: #{critic_forward.1} parent=1 // pred_fallthru
      _
    // Predicated region
    $region14: #{critic_forward.1} parent=1 // pred_check
      _
    $region15: #{critic_forward.1} parent=1 // pred_check_branch
      %22 = sbr.rel (0) target = $region17
    $region16: #{critic_forward.1} parent=1 // pred_region
      %s24 = ssub.s32 4096, 4096
      %25 = vsyncadd [#allocation4], %s24
      %s26 = sshll.u32 [#allocation3], 4
      %s27 = int_to_ptr.vmem [resolvable:$true] %s26
      %32 = dma.hbm_to_vmem [thread:$0]  %s3, 4096, %s27, [#allocation4], 128, 128, 8
    $region17: #{critic_forward.1} parent=1 // pred_fallthru
      _
    // Predicated region
    $region18: #{critic_forward.1} parent=1 // pred_check
      _
    $region19: #{critic_forward.1} parent=1 // pred_check_branch
      %34 = sbr.rel (0) target = $region21
    $region20: #{critic_forward.1} parent=1 // pred_region
      _
    $region21: #{critic_forward.1} parent=1 // pred_fallthru
      _
    // Predicated region
    $region22: #{critic_forward.1} parent=1 // pred_check
      _
    $region23: #{critic_forward.1} parent=1 // pred_check_branch
      %36 = sbr.rel (0) target = $region25
    $region24: #{critic_forward.1} parent=1 // pred_region
      _
    $region25: #{critic_forward.1} parent=1 // pred_fallthru
      _
    // Predicated region
    $region26: #{critic_forward.1} parent=1 // pred_check
      _
    $region27: #{critic_forward.1} parent=1 // pred_check_branch
      %38 = sbr.rel (0) target = $region29
    $region28: #{critic_forward.1} parent=1 // pred_region
      _
    $region29: #{critic_forward.1} parent=1 // pred_fallthru
      _
    // Predicated region
    $region30: #{critic_forward.1} parent=1 // pred_check
      _
    $region31: #{critic_forward.1} parent=1 // pred_check_branch
      %40 = sbr.rel (0) target = $region33
    $region32: #{critic_forward.1} parent=1 // pred_region
      %41 = dma.done [#allocation4], 4096
    $region33: #{critic_forward.1} parent=1 // pred_fallthru
      _
    %v43 = vld [vmem:[%s0] sm:$0xff]
    %v44 = vld [vmem:[%s0 + $0x8] sm:$0xff]
    %v45 = vld [vmem:[%s0 + $0x10] sm:$0xff]
    %v46 = vld [vmem:[%s0 + $0x18] sm:$0xff]
    %v47 = vld [vmem:[%s0 + $0x20] sm:$0xff]
    %v48 = vld [vmem:[%s0 + $0x28] sm:$0xff]
    %v49 = vld [vmem:[%s0 + $0x30] sm:$0xff]
    %v50 = vld [vmem:[%s0 + $0x38] sm:$0xff]
    %v51 = vld [vmem:[%s0 + $0x40] sm:$0xff]
    %v52 = vld [vmem:[%s0 + $0x48] sm:$0xff]
    %v53 = vld [vmem:[%s0 + $0x50] sm:$0xff]
    %v54 = vld [vmem:[%s0 + $0x58] sm:$0xff]
    %v55 = vld [vmem:[%s0 + $0x60] sm:$0xff]
    %v56 = vld [vmem:[%s0 + $0x68] sm:$0xff]
    %v57 = vld [vmem:[%s0 + $0x70] sm:$0xff]
    %v58 = vld [vmem:[%s0 + $0x78] sm:$0xff]
    %v59 = vpack.c.bf16 %v44, %v43
    %v60 = vpack.c.bf16 %v46, %v45
    %v61 = vpack.c.bf16 %v48, %v47
    %v62 = vpack.c.bf16 %v50, %v49
    %v63 = vpack.c.bf16 %v52, %v51
    %v64 = vpack.c.bf16 %v54, %v53
    %v65 = vpack.c.bf16 %v56, %v55
    %v66 = vpack.c.bf16 %v58, %v57
    %v67 = vld [vmem:[%s1] sm:$0xff]
    %v68 = vld [vmem:[%s1 + $0x8] sm:$0xff]
    %v69 = vld [vmem:[%s1 + $0x10] sm:$0xff]
    %v70 = vld [vmem:[%s1 + $0x18] sm:$0xff]
    %v71 = vld [vmem:[%s2] sm:$0x3]
    %v73 = vlaneseq
    %v74 = vshrl.u32 %v73, 7
    %v75 = vsub.s32 0, %v74
    %v76 = vrot.slane %v71, %v75
    %v77 = vlaneseq
    %v78 = vshrl.u32 %v77, 7
    %v79 = vsub.s32 1, %v78
    %v80 = vrot.slane %v71, %v79
    %v87 = vunpack.c.l.b16 %v67
    %v88 = vunpack.c.h.b16 %v67
    %v89 = vunpack.c.l.b16 %v68
    %v90 = vunpack.c.h.b16 %v68
    %v91 = vunpack.c.l.b16 %v69
    %v92 = vunpack.c.h.b16 %v69
    %v93 = vunpack.c.l.b16 %v70
    %v94 = vunpack.c.h.b16 %v70
    %v95 = vpack.c.b16 %v89, %v87
    %v96 = vpack.c.b16 %v90, %v88
    %v97 = vpack.c.b16 %v93, %v91
    %v98 = vpack.c.b16 %v94, %v92
    %vm103 = vcmask 261120
    %v105 = vsel %vm103, %v59, 0
    %v108 = vsel %vm103, %v60, 0
    %v111 = vsel %vm103, %v61, 0
    %v114 = vsel %vm103, %v62, 0
    %v117 = vsel %vm103, %v63, 0
    %v120 = vsel %vm103, %v64, 0
    %v123 = vsel %vm103, %v65, 0
    %v126 = vsel %vm103, %v66, 0
    %128 = vmatprep.subr.bf16.mxu0 %v96
    %129 = vmatpush1.bf16.msra.mxu0 %v95
    %130 = vmatprep.subr.bf16.mxu0 %v98
    %131 = vmatpush1.bf16.msra.mxu0 %v97
    %132 = vmatprep.subr.bf16.mxu0 0
    %133 = vmatpush1.bf16.msra.mxu0 0
    %134 = vmatprep.subr.bf16.mxu0 0
    %135 = vmatpush1.bf16.msra.mxu0 0
    %136 = vmatprep.subr.bf16.mxu0 0
    %137 = vmatpush1.bf16.msra.mxu0 0
    %138 = vmatprep.subr.bf16.mxu0 0
    %139 = vmatpush1.bf16.msra.mxu0 0
    %140 = vmatprep.subr.bf16.mxu0 0
    %141 = vmatpush1.bf16.msra.mxu0 0
    %142 = vmatprep.subr.bf16.mxu0 0
    %143 = vmatpush1.bf16.msra.mxu0 0
    %144 = vmatprep.subr.bf16.mxu0 0
    %145 = vmatpush1.bf16.msra.mxu0 0
    %146 = vmatprep.subr.bf16.mxu0 0
    %147 = vmatpush1.bf16.msra.mxu0 0
    %148 = vmatprep.subr.bf16.mxu0 0
    %149 = vmatpush1.bf16.msra.mxu0 0
    %150 = vmatprep.subr.bf16.mxu0 0
    %151 = vmatpush1.bf16.msra.mxu0 0
    %152 = vmatprep.subr.bf16.mxu0 0
    %153 = vmatpush1.bf16.msra.mxu0 0
    %154 = vmatprep.subr.bf16.mxu0 0
    %155 = vmatpush1.bf16.msra.mxu0 0
    %156 = vmatprep.subr.bf16.mxu0 0
    %157 = vmatpush1.bf16.msra.mxu0 0
    %158 = vmatprep.subr.bf16.mxu0 0
    %159 = vmatpush1.bf16.msra.mxu0 0
    %160 = vmatprep.mubr.bf16.mxu0 0
    %161 = vmatmul.mubr.bf16.gmra.mrb[0].mxu0 %v105
    %v162 = vpop.f32.mrb[0].mxu0
    %v163 = vadd.f32 %v76, %v162
    %v164 = vpop.f32.mrb[0].mxu0
    %v165 = vadd.f32 %v80, %v164
    %v166 = vpop.f32.mrb[0].mxu0
    %v167 = vadd.f32 %v76, %v166
    %v168 = vpop.f32.mrb[0].mxu0
    %v169 = vadd.f32 %v80, %v168
    %170 = vmatprep.mubr.bf16.mxu0 0
    %171 = vmatmul.mubr.bf16.gmra.mrb[0].mxu0 %v108
    %v172 = vpop.f32.mrb[0].mxu0
    %v173 = vadd.f32 %v76, %v172
    %v174 = vpop.f32.mrb[0].mxu0
    %v175 = vadd.f32 %v80, %v174
    %v176 = vpop.f32.mrb[0].mxu0
    %v177 = vadd.f32 %v76, %v176
    %v178 = vpop.f32.mrb[0].mxu0
    %v179 = vadd.f32 %v80, %v178
    %180 = vmatprep.mubr.bf16.mxu0 0
    %181 = vmatmul.mubr.bf16.gmra.mrb[0].mxu0 %v111
    %v182 = vpop.f32.mrb[0].mxu0
    %v183 = vadd.f32 %v76, %v182
    %v184 = vpop.f32.mrb[0].mxu0
    %v185 = vadd.f32 %v80, %v184
    %v186 = vpop.f32.mrb[0].mxu0
    %v187 = vadd.f32 %v76, %v186
    %v188 = vpop.f32.mrb[0].mxu0
    %v189 = vadd.f32 %v80, %v188
    %190 = vmatprep.mubr.bf16.mxu0 0
    %191 = vmatmul.mubr.bf16.gmra.mrb[0].mxu0 %v114
    %v192 = vpop.f32.mrb[0].mxu0
    %v193 = vadd.f32 %v76, %v192
    %v194 = vpop.f32.mrb[0].mxu0
    %v195 = vadd.f32 %v80, %v194
    %v196 = vpop.f32.mrb[0].mxu0
    %v197 = vadd.f32 %v76, %v196
    %v198 = vpop.f32.mrb[0].mxu0
    %v199 = vadd.f32 %v80, %v198
    %200 = vmatprep.mubr.bf16.mxu0 0
    %201 = vmatmul.mubr.bf16.gmra.mrb[0].mxu0 %v117
    %v202 = vpop.f32.mrb[0].mxu0
    %v203 = vadd.f32 %v76, %v202
    %v204 = vpop.f32.mrb[0].mxu0
    %v205 = vadd.f32 %v80, %v204
    %v206 = vpop.f32.mrb[0].mxu0
    %v207 = vadd.f32 %v76, %v206
    %v208 = vpop.f32.mrb[0].mxu0
    %v209 = vadd.f32 %v80, %v208
    %210 = vmatprep.mubr.bf16.mxu0 0
    %211 = vmatmul.mubr.bf16.gmra.mrb[0].mxu0 %v120
    %v212 = vpop.f32.mrb[0].mxu0
    %v213 = vadd.f32 %v76, %v212
    %v214 = vpop.f32.mrb[0].mxu0
    %v215 = vadd.f32 %v80, %v214
    %v216 = vpop.f32.mrb[0].mxu0
    %v217 = vadd.f32 %v76, %v216
    %v218 = vpop.f32.mrb[0].mxu0
    %v219 = vadd.f32 %v80, %v218
    %220 = vmatprep.mubr.bf16.mxu0 0
    %221 = vmatmul.mubr.bf16.gmra.mrb[0].mxu0 %v123
    %v222 = vpop.f32.mrb[0].mxu0
    %v223 = vadd.f32 %v76, %v222
    %v224 = vpop.f32.mrb[0].mxu0
    %v225 = vadd.f32 %v80, %v224
    %v226 = vpop.f32.mrb[0].mxu0
    %v227 = vadd.f32 %v76, %v226
    %v228 = vpop.f32.mrb[0].mxu0
    %v229 = vadd.f32 %v80, %v228
    %230 = vmatprep.mubr.bf16.mxu0 0
    %231 = vmatmul.mubr.bf16.gmra.mrb[0].mxu0 %v126
    %v232 = vpop.f32.mrb[0].mxu0
    %v233 = vadd.f32 %v76, %v232
    %v234 = vpop.f32.mrb[0].mxu0
    %v235 = vadd.f32 %v80, %v234
    %v236 = vpop.f32.mrb[0].mxu0
    %v237 = vadd.f32 %v76, %v236
    %v238 = vpop.f32.mrb[0].mxu0
    %v239 = vadd.f32 %v80, %v238
    %240 = vdwg.mxu0
    %v241 = vmax.f32 %v163, 0.0
    %v242 = vmax.f32 %v165, 0.0
    %v243 = vmax.f32 %v167, 0.0
    %v244 = vmax.f32 %v169, 0.0
    %v245 = vmax.f32 %v173, 0.0
    %v246 = vmax.f32 %v175, 0.0
    %v247 = vmax.f32 %v177, 0.0
    %v248 = vmax.f32 %v179, 0.0
    %v249 = vmax.f32 %v183, 0.0
    %v250 = vmax.f32 %v185, 0.0
    %v251 = vmax.f32 %v187, 0.0
    %v252 = vmax.f32 %v189, 0.0
    %v253 = vmax.f32 %v193, 0.0
    %v254 = vmax.f32 %v195, 0.0
    %v255 = vmax.f32 %v197, 0.0
    %v256 = vmax.f32 %v199, 0.0
    %v257 = vmax.f32 %v203, 0.0
    %v258 = vmax.f32 %v205, 0.0
    %v259 = vmax.f32 %v207, 0.0
    %v260 = vmax.f32 %v209, 0.0
    %v261 = vmax.f32 %v213, 0.0
    %v262 = vmax.f32 %v215, 0.0
    %v263 = vmax.f32 %v217, 0.0
    %v264 = vmax.f32 %v219, 0.0
    %v265 = vmax.f32 %v223, 0.0
    %v266 = vmax.f32 %v225, 0.0
    %v267 = vmax.f32 %v227, 0.0
    %v268 = vmax.f32 %v229, 0.0
    %v269 = vmax.f32 %v233, 0.0
    %v270 = vmax.f32 %v235, 0.0
    %v271 = vmax.f32 %v237, 0.0
    %v272 = vmax.f32 %v239, 0.0
    %v273 = vpack.c.bf16 %v243, %v241
    %v274 = vpack.c.bf16 %v244, %v242
    %v275 = vpack.c.bf16 %v247, %v245
    %v276 = vpack.c.bf16 %v248, %v246
    %v277 = vpack.c.bf16 %v251, %v249
    %v278 = vpack.c.bf16 %v252, %v250
    %v279 = vpack.c.bf16 %v255, %v253
    %v280 = vpack.c.bf16 %v256, %v254
    %v281 = vpack.c.bf16 %v259, %v257
    %v282 = vpack.c.bf16 %v260, %v258
    %v283 = vpack.c.bf16 %v263, %v261
    %v284 = vpack.c.bf16 %v264, %v262
    %v285 = vpack.c.bf16 %v267, %v265
    %v286 = vpack.c.bf16 %v268, %v266
    %v287 = vpack.c.bf16 %v271, %v269
    %v288 = vpack.c.bf16 %v272, %v270
    %v289 = vld [vmem:[#allocation3] sm:$0xff]
    %v290 = vld [vmem:[#allocation3 + $0x8] sm:$0xff]
    %v291 = vld [vmem:[#allocation3 + $0x10] sm:$0xff]
    %v292 = vld [vmem:[#allocation3 + $0x18] sm:$0xff]
    %v293 = vld [vmem:[#allocation3 + $0x20] sm:$0xff]
    %v294 = vld [vmem:[#allocation3 + $0x28] sm:$0xff]
    %v295 = vld [vmem:[#allocation3 + $0x30] sm:$0xff]
    %v296 = vld [vmem:[#allocation3 + $0x38] sm:$0xff]
    %v297 = vld [vmem:[#allocation3 + $0x40] sm:$0xff]
    %v298 = vld [vmem:[#allocation3 + $0x48] sm:$0xff]
    %v299 = vld [vmem:[#allocation3 + $0x50] sm:$0xff]
    %v300 = vld [vmem:[#allocation3 + $0x58] sm:$0xff]
    %v301 = vld [vmem:[#allocation3 + $0x60] sm:$0xff]
    %v302 = vld [vmem:[#allocation3 + $0x68] sm:$0xff]
    %v303 = vld [vmem:[#allocation3 + $0x70] sm:$0xff]
    %v304 = vld [vmem:[#allocation3 + $0x78] sm:$0xff]
    %v305 = vld [vmem:[#allocation3 + $0x80] sm:$0xff]
    %v306 = vld [vmem:[#allocation3 + $0x88] sm:$0xff]
    %v307 = vld [vmem:[#allocation3 + $0x90] sm:$0xff]
    %v308 = vld [vmem:[#allocation3 + $0x98] sm:$0xff]
    %v309 = vld [vmem:[#allocation3 + $0xa0] sm:$0xff]
    %v310 = vld [vmem:[#allocation3 + $0xa8] sm:$0xff]
    %v311 = vld [vmem:[#allocation3 + $0xb0] sm:$0xff]
    %v312 = vld [vmem:[#allocation3 + $0xb8] sm:$0xff]
    %v313 = vld [vmem:[#allocation3 + $0xc0] sm:$0xff]
    %v314 = vld [vmem:[#allocation3 + $0xc8] sm:$0xff]
    %v315 = vld [vmem:[#allocation3 + $0xd0] sm:$0xff]
    %v316 = vld [vmem:[#allocation3 + $0xd8] sm:$0xff]
    %v317 = vld [vmem:[#allocation3 + $0xe0] sm:$0xff]
    %v318 = vld [vmem:[#allocation3 + $0xe8] sm:$0xff]
    %v319 = vld [vmem:[#allocation3 + $0xf0] sm:$0xff]
    %v320 = vld [vmem:[#allocation3 + $0xf8] sm:$0xff]
    %v321 = vld [vmem:[%s4] sm:$0x3]
    %v323 = vlaneseq
    %v324 = vshrl.u32 %v323, 7
    %v325 = vsub.s32 0, %v324
    %v326 = vrot.slane %v321, %v325
    %v327 = vlaneseq
    %v328 = vshrl.u32 %v327, 7
    %v329 = vsub.s32 1, %v328
    %v330 = vrot.slane %v321, %v329
    %v365 = vunpack.c.l.b16 %v289
    %v366 = vunpack.c.h.b16 %v289
    %v367 = vunpack.c.l.b16 %v290
    %v368 = vunpack.c.h.b16 %v290
    %v369 = vunpack.c.l.b16 %v291
    %v370 = vunpack.c.h.b16 %v291
    %v371 = vunpack.c.l.b16 %v292
    %v372 = vunpack.c.h.b16 %v292
    %v373 = vunpack.c.l.b16 %v293
    %v374 = vunpack.c.h.b16 %v293
    %v375 = vunpack.c.l.b16 %v294
    %v376 = vunpack.c.h.b16 %v294
    %v377 = vunpack.c.l.b16 %v295
    %v378 = vunpack.c.h.b16 %v295
    %v379 = vunpack.c.l.b16 %v296
    %v380 = vunpack.c.h.b16 %v296
    %v381 = vunpack.c.l.b16 %v297
    %v382 = vunpack.c.h.b16 %v297
    %v383 = vunpack.c.l.b16 %v298
    %v384 = vunpack.c.h.b16 %v298
    %v385 = vunpack.c.l.b16 %v299
    %v386 = vunpack.c.h.b16 %v299
    %v387 = vunpack.c.l.b16 %v300
    %v388 = vunpack.c.h.b16 %v300
    %v389 = vunpack.c.l.b16 %v301
    %v390 = vunpack.c.h.b16 %v301
    %v391 = vunpack.c.l.b16 %v302
    %v392 = vunpack.c.h.b16 %v302
    %v393 = vunpack.c.l.b16 %v303
    %v394 = vunpack.c.h.b16 %v303
    %v395 = vunpack.c.l.b16 %v304
    %v396 = vunpack.c.h.b16 %v304
    %v397 = vunpack.c.l.b16 %v305
    %v398 = vunpack.c.h.b16 %v305
    %v399 = vunpack.c.l.b16 %v306
    %v400 = vunpack.c.h.b16 %v306
    %v401 = vunpack.c.l.b16 %v307
    %v402 = vunpack.c.h.b16 %v307
    %v403 = vunpack.c.l.b16 %v308
    %v404 = vunpack.c.h.b16 %v308
    %v405 = vunpack.c.l.b16 %v309
    %v406 = vunpack.c.h.b16 %v309
    %v407 = vunpack.c.l.b16 %v310
    %v408 = vunpack.c.h.b16 %v310
    %v409 = vunpack.c.l.b16 %v311
    %v410 = vunpack.c.h.b16 %v311
    %v411 = vunpack.c.l.b16 %v312
    %v412 = vunpack.c.h.b16 %v312
    %v413 = vunpack.c.l.b16 %v313
    %v414 = vunpack.c.h.b16 %v313
    %v415 = vunpack.c.l.b16 %v314
    %v416 = vunpack.c.h.b16 %v314
    %v417 = vunpack.c.l.b16 %v315
    %v418 = vunpack.c.h.b16 %v315
    %v419 = vunpack.c.l.b16 %v316
    %v420 = vunpack.c.h.b16 %v316
    %v421 = vunpack.c.l.b16 %v317
    %v422 = vunpack.c.h.b16 %v317
    %v423 = vunpack.c.l.b16 %v318
    %v424 = vunpack.c.h.b16 %v318
    %v425 = vunpack.c.l.b16 %v319
    %v426 = vunpack.c.h.b16 %v319
    %v427 = vunpack.c.l.b16 %v320
    %v428 = vunpack.c.h.b16 %v320
    %v429 = vpack.c.b16 %v367, %v365
    %v430 = vpack.c.b16 %v368, %v366
    %v431 = vpack.c.b16 %v371, %v369
    %v432 = vpack.c.b16 %v372, %v370
    %v433 = vpack.c.b16 %v375, %v373
    %v434 = vpack.c.b16 %v376, %v374
    %v435 = vpack.c.b16 %v379, %v377
    %v436 = vpack.c.b16 %v380, %v378
    %v437 = vpack.c.b16 %v383, %v381
    %v438 = vpack.c.b16 %v384, %v382
    %v439 = vpack.c.b16 %v387, %v385
    %v440 = vpack.c.b16 %v388, %v386
    %v441 = vpack.c.b16 %v391, %v389
    %v442 = vpack.c.b16 %v392, %v390
    %v443 = vpack.c.b16 %v395, %v393
    %v444 = vpack.c.b16 %v396, %v394
    %v445 = vpack.c.b16 %v399, %v397
    %v446 = vpack.c.b16 %v400, %v398
    %v447 = vpack.c.b16 %v403, %v401
    %v448 = vpack.c.b16 %v404, %v402
    %v449 = vpack.c.b16 %v407, %v405
    %v450 = vpack.c.b16 %v408, %v406
    %v451 = vpack.c.b16 %v411, %v409
    %v452 = vpack.c.b16 %v412, %v410
    %v453 = vpack.c.b16 %v415, %v413
    %v454 = vpack.c.b16 %v416, %v414
    %v455 = vpack.c.b16 %v419, %v417
    %v456 = vpack.c.b16 %v420, %v418
    %v457 = vpack.c.b16 %v423, %v421
    %v458 = vpack.c.b16 %v424, %v422
    %v459 = vpack.c.b16 %v427, %v425
    %v460 = vpack.c.b16 %v428, %v426
    %493 = vmatprep.subr.bf16.mxu0 %v430
    %494 = vmatpush1.bf16.msra.mxu0 %v429
    %495 = vmatprep.subr.bf16.mxu0 %v432
    %496 = vmatpush1.bf16.msra.mxu0 %v431
    %497 = vmatprep.subr.bf16.mxu0 %v434
    %498 = vmatpush1.bf16.msra.mxu0 %v433
    %499 = vmatprep.subr.bf16.mxu0 %v436
    %500 = vmatpush1.bf16.msra.mxu0 %v435
    %501 = vmatprep.subr.bf16.mxu0 %v438
    %502 = vmatpush1.bf16.msra.mxu0 %v437
    %503 = vmatprep.subr.bf16.mxu0 %v440
    %504 = vmatpush1.bf16.msra.mxu0 %v439
    %505 = vmatprep.subr.bf16.mxu0 %v442
    %506 = vmatpush1.bf16.msra.mxu0 %v441
    %507 = vmatprep.subr.bf16.mxu0 %v444
    %508 = vmatpush1.bf16.msra.mxu0 %v443
    %509 = vmatprep.subr.bf16.mxu0 %v446
    %510 = vmatpush1.bf16.msra.mxu0 %v445
    %511 = vmatprep.subr.bf16.mxu0 %v448
    %512 = vmatpush1.bf16.msra.mxu0 %v447
    %513 = vmatprep.subr.bf16.mxu0 %v450
    %514 = vmatpush1.bf16.msra.mxu0 %v449
    %515 = vmatprep.subr.bf16.mxu0 %v452
    %516 = vmatpush1.bf16.msra.mxu0 %v451
    %517 = vmatprep.subr.bf16.mxu0 %v454
    %518 = vmatpush1.bf16.msra.mxu0 %v453
    %519 = vmatprep.subr.bf16.mxu0 %v456
    %520 = vmatpush1.bf16.msra.mxu0 %v455
    %521 = vmatprep.subr.bf16.mxu0 %v458
    %522 = vmatpush1.bf16.msra.mxu0 %v457
    %523 = vmatprep.subr.bf16.mxu0 %v460
    %524 = vmatpush1.bf16.msra.mxu0 %v459
    %525 = vmatprep.mubr.bf16.mxu0 %v274
    %526 = vmatmul.mubr.bf16.gmra.mrb[0].mxu0 %v273
    %v527 = vpop.f32.mrb[0].mxu0
    %v528 = vadd.f32 %v326, %v527
    %v529 = vpop.f32.mrb[0].mxu0
    %v530 = vadd.f32 %v330, %v529
    %v531 = vpop.f32.mrb[0].mxu0
    %v532 = vadd.f32 %v326, %v531
    %v533 = vpop.f32.mrb[0].mxu0
    %v534 = vadd.f32 %v330, %v533
    %535 = vmatprep.mubr.bf16.mxu0 %v276
    %536 = vmatmul.mubr.bf16.gmra.mrb[0].mxu0 %v275
    %v537 = vpop.f32.mrb[0].mxu0
    %v538 = vadd.f32 %v326, %v537
    %v539 = vpop.f32.mrb[0].mxu0
    %v540 = vadd.f32 %v330, %v539
    %v541 = vpop.f32.mrb[0].mxu0
    %v542 = vadd.f32 %v326, %v541
    %v543 = vpop.f32.mrb[0].mxu0
    %v544 = vadd.f32 %v330, %v543
    %545 = vmatprep.mubr.bf16.mxu0 %v278
    %546 = vmatmul.mubr.bf16.gmra.mrb[0].mxu0 %v277
    %v547 = vpop.f32.mrb[0].mxu0
    %v548 = vadd.f32 %v326, %v547
    %v549 = vpop.f32.mrb[0].mxu0
    %v550 = vadd.f32 %v330, %v549
    %v551 = vpop.f32.mrb[0].mxu0
    %v552 = vadd.f32 %v326, %v551
    %v553 = vpop.f32.mrb[0].mxu0
    %v554 = vadd.f32 %v330, %v553
    %555 = vmatprep.mubr.bf16.mxu0 %v280
    %556 = vmatmul.mubr.bf16.gmra.mrb[0].mxu0 %v279
    %v557 = vpop.f32.mrb[0].mxu0
    %v558 = vadd.f32 %v326, %v557
    %v559 = vpop.f32.mrb[0].mxu0
    %v560 = vadd.f32 %v330, %v559
    %v561 = vpop.f32.mrb[0].mxu0
    %v562 = vadd.f32 %v326, %v561
    %v563 = vpop.f32.mrb[0].mxu0
    %v564 = vadd.f32 %v330, %v563
    %565 = vmatprep.mubr.bf16.mxu0 %v282
    %566 = vmatmul.mubr.bf16.gmra.mrb[0].mxu0 %v281
    %v567 = vpop.f32.mrb[0].mxu0
    %v568 = vadd.f32 %v326, %v567
    %v569 = vpop.f32.mrb[0].mxu0
    %v570 = vadd.f32 %v330, %v569
    %v571 = vpop.f32.mrb[0].mxu0
    %v572 = vadd.f32 %v326, %v571
    %v573 = vpop.f32.mrb[0].mxu0
    %v574 = vadd.f32 %v330, %v573
    %575 = vmatprep.mubr.bf16.mxu0 %v284
    %576 = vmatmul.mubr.bf16.gmra.mrb[0].mxu0 %v283
    %v577 = vpop.f32.mrb[0].mxu0
    %v578 = vadd.f32 %v326, %v577
    %v579 = vpop.f32.mrb[0].mxu0
    %v580 = vadd.f32 %v330, %v579
    %v581 = vpop.f32.mrb[0].mxu0
    %v582 = vadd.f32 %v326, %v581
    %v583 = vpop.f32.mrb[0].mxu0
    %v584 = vadd.f32 %v330, %v583
    %585 = vmatprep.mubr.bf16.mxu0 %v286
    %586 = vmatmul.mubr.bf16.gmra.mrb[0].mxu0 %v285
    %v587 = vpop.f32.mrb[0].mxu0
    %v588 = vadd.f32 %v326, %v587
    %v589 = vpop.f32.mrb[0].mxu0
    %v590 = vadd.f32 %v330, %v589
    %v591 = vpop.f32.mrb[0].mxu0
    %v592 = vadd.f32 %v326, %v591
    %v593 = vpop.f32.mrb[0].mxu0
    %v594 = vadd.f32 %v330, %v593
    %595 = vmatprep.mubr.bf16.mxu0 %v288
    %596 = vmatmul.mubr.bf16.gmra.mrb[0].mxu0 %v287
    %v597 = vpop.f32.mrb[0].mxu0
    %v598 = vadd.f32 %v326, %v597
    %v599 = vpop.f32.mrb[0].mxu0
    %v600 = vadd.f32 %v330, %v599
    %v601 = vpop.f32.mrb[0].mxu0
    %v602 = vadd.f32 %v326, %v601
    %v603 = vpop.f32.mrb[0].mxu0
    %v604 = vadd.f32 %v330, %v603
    %605 = vdwg.mxu0
    %v606 = vmax.f32 %v528, 0.0
    %v607 = vmax.f32 %v530, 0.0
    %v608 = vmax.f32 %v532, 0.0
    %v609 = vmax.f32 %v534, 0.0
    %v610 = vmax.f32 %v538, 0.0
    %v611 = vmax.f32 %v540, 0.0
    %v612 = vmax.f32 %v542, 0.0
    %v613 = vmax.f32 %v544, 0.0
    %v614 = vmax.f32 %v548, 0.0
    %v615 = vmax.f32 %v550, 0.0
    %v616 = vmax.f32 %v552, 0.0
    %v617 = vmax.f32 %v554, 0.0
    %v618 = vmax.f32 %v558, 0.0
    %v619 = vmax.f32 %v560, 0.0
    %v620 = vmax.f32 %v562, 0.0
    %v621 = vmax.f32 %v564, 0.0
    %v622 = vmax.f32 %v568, 0.0
    %v623 = vmax.f32 %v570, 0.0
    %v624 = vmax.f32 %v572, 0.0
    %v625 = vmax.f32 %v574, 0.0
    %v626 = vmax.f32 %v578, 0.0
    %v627 = vmax.f32 %v580, 0.0
    %v628 = vmax.f32 %v582, 0.0
    %v629 = vmax.f32 %v584, 0.0
    %v630 = vmax.f32 %v588, 0.0
    %v631 = vmax.f32 %v590, 0.0
    %v632 = vmax.f32 %v592, 0.0
    %v633 = vmax.f32 %v594, 0.0
    %v634 = vmax.f32 %v598, 0.0
    %v635 = vmax.f32 %v600, 0.0
    %v636 = vmax.f32 %v602, 0.0
    %v637 = vmax.f32 %v604, 0.0
    %v638 = vld [vmem:[%s5] sm:$0xff]
    %v639 = vpack.c.bf16 %v608, %v606
    %v640 = vpack.c.bf16 %v609, %v607
    %v641 = vpack.c.bf16 %v612, %v610
    %v642 = vpack.c.bf16 %v613, %v611
    %v643 = vpack.c.bf16 %v616, %v614
    %v644 = vpack.c.bf16 %v617, %v615
    %v645 = vpack.c.bf16 %v620, %v618
    %v646 = vpack.c.bf16 %v621, %v619
    %v647 = vpack.c.bf16 %v624, %v622
    %v648 = vpack.c.bf16 %v625, %v623
    %v649 = vpack.c.bf16 %v628, %v626
    %v650 = vpack.c.bf16 %v629, %v627
    %v651 = vpack.c.bf16 %v632, %v630
    %v652 = vpack.c.bf16 %v633, %v631
    %v653 = vpack.c.bf16 %v636, %v634
    %v654 = vpack.c.bf16 %v637, %v635
    %v656 = vunpack.c.l.b16 %v638
    %v657 = vunpack.c.h.b16 %v638
    %v658 = vpack.c.b16 %v656, %v656
    %v659 = vpack.c.b16 %v657, %v657
    %662 = vmatprep.subr.bf16.mxu0 %v640
    %663 = vmatpush1.bf16.xpose.msra.mxu0 %v639
    %664 = vmatprep.subr.bf16.mxu0 %v642
    %665 = vmatpush1.bf16.xpose.msra.mxu0 %v641
    %666 = vmatprep.subr.bf16.mxu0 %v644
    %667 = vmatpush1.bf16.xpose.msra.mxu0 %v643
    %668 = vmatprep.subr.bf16.mxu0 %v646
    %669 = vmatpush1.bf16.xpose.msra.mxu0 %v645
    %670 = vmatprep.subr.bf16.mxu0 %v648
    %671 = vmatpush1.bf16.xpose.msra.mxu0 %v647
    %672 = vmatprep.subr.bf16.mxu0 %v650
    %673 = vmatpush1.bf16.xpose.msra.mxu0 %v649
    %674 = vmatprep.subr.bf16.mxu0 %v652
    %675 = vmatpush1.bf16.xpose.msra.mxu0 %v651
    %676 = vmatprep.subr.bf16.mxu0 %v654
    %677 = vmatpush1.bf16.xpose.msra.mxu0 %v653
    %678 = vmatprep.subr.bf16.mxu0 0
    %679 = vmatpush1.bf16.xpose.msra.mxu0 0
    %680 = vmatprep.subr.bf16.mxu0 0
    %681 = vmatpush1.bf16.xpose.msra.mxu0 0
    %682 = vmatprep.subr.bf16.mxu0 0
    %683 = vmatpush1.bf16.xpose.msra.mxu0 0
    %684 = vmatprep.subr.bf16.mxu0 0
    %685 = vmatpush1.bf16.xpose.msra.mxu0 0
    %686 = vmatprep.subr.bf16.mxu0 0
    %687 = vmatpush1.bf16.xpose.msra.mxu0 0
    %688 = vmatprep.subr.bf16.mxu0 0
    %689 = vmatpush1.bf16.xpose.msra.mxu0 0
    %690 = vmatprep.subr.bf16.mxu0 0
    %691 = vmatpush1.bf16.xpose.msra.mxu0 0
    %692 = vmatprep.subr.bf16.mxu0 0
    %693 = vmatpush1.bf16.xpose.msra.mxu0 0
    %694 = vmatprep.mubr.bf16.mxu0 %v659
    %695 = vmatmul.mubr.bf16.gmra.mrb[0].mxu0 %v658
    %v696 = vpop.f32.mrb[0].mxu0
    %v697 = vadd.f32 0.0, %v696
    %v698 = vpop.f32.mrb[0].mxu0
    %v699 = vpop.f32.mrb[0].mxu0
    %v700 = vpop.f32.mrb[0].mxu0
    %701 = vdwg.mxu0
    %v702 = vld [vmem:[#allocation2] sm:$0x1]
    %704 = vset.pattern.permute.xlu0 0
    %705 = vperm.xlu0 %704, %v702
    %v706 = vpop.permute.xlu0 %705
    %v708 = vlaneseq
    %v709 = vshrl.u32 %v708, 7
    %v710 = vsub.s32 0, %v709
    %v711 = vrot.slane %v706, %v710
    %v712 = vadd.f32 %v697, %v711
    %713 = vst [vmem:[%s7] sm:$0x1] %v712
    // Predicated region
    $region34: #{critic_forward.1} parent=1 // pred_check
      _
    $region35: #{critic_forward.1} parent=1 // pred_check_branch
      %715 = sbr.rel (0) target = $region37
    $region36: #{critic_forward.1} parent=1 // pred_region
      _
    $region37: #{critic_forward.1} parent=1 // pred_fallthru
      _
    // Predicated region
    $region38: #{critic_forward.1} parent=1 // pred_check
      _
    $region39: #{critic_forward.1} parent=1 // pred_check_branch
      %717 = sbr.rel (0) target = $region41
    $region40: #{critic_forward.1} parent=1 // pred_region
      _
    $region41: #{critic_forward.1} parent=1 // pred_fallthru
      _
    %718 = vsyncpa [#allocation4], 1

</llo_original>
